<compile_context>
chip_gen: v5e
topology: v5e:2x2
jax: 0.10.0
libtpu: 0.0.40
codegen_flags: <defaults>
</compile_context>

<pallas_src>
import jax
import jax.numpy as jnp
from jax.experimental import pallas as pl
from jax.experimental.pallas import tpu as pltpu

INPUT_DIM1 = 32   # encoder input
INPUT_DIM2 = 44   # gnn input (= 32 encoded + 12 passthrough)
HIDDEN_DIM1 = 32
HIDDEN_DIM2 = 32  # gnn hidden
OUTPUT_DIM1 = 32  # encoder output
OUTPUT_DIM2 = 12  # readout output
READOUT_HID = 64
LANE = 128        # lane-padded feature width used inside the kernel


# ----------------------------- fused Pallas kernel ---------------------------

def _fused_pgsage_kernel(x_ref, a_ref,
                         ew1_ref, eb1_ref, ew2_ref, eb2_ref,
                         s1w_ref, s1b_ref, s2w_ref, s2b_ref,
                         rw1_ref, rb1_ref, rw2_ref, rb2_ref,
                         o_ref):
    f32 = jnp.float32
    x = x_ref[...]          # [N, 128]; lanes 0:44 = real features, 44:128 = 0
    a = a_ref[...]          # [N, N] row-normalized adjacency

    # ---- encoder MLP (weights are zero-padded, so no in-kernel slicing) -----
    h = jnp.dot(x, ew1_ref[...], preferred_element_type=f32) + eb1_ref[...]
    h = jnp.maximum(h, 0.0)                                    # [N, 32]
    h = jnp.dot(h, ew2_ref[...], preferred_element_type=f32) + eb2_ref[...]
    h = jnp.maximum(h, 0.0)                                    # [N, 128]; lanes 32: are 0

    # ---- concat(encoded, passthrough) entirely in vregs ---------------------
    lane = jax.lax.broadcasted_iota(jnp.int32, x.shape, 1)
    passthrough = jnp.where(lane >= INPUT_DIM1, x, 0.0)        # lanes 32:44 of x
    h = h + passthrough                                        # [N, 128] gnn input

    # ---- SAGEConv 1: fused lin_l/lin_r as one K=256 matmul -------------------
    agg = jnp.dot(a, h, preferred_element_type=f32)            # mean neighbor aggr
    cat = jnp.concatenate([agg, h], axis=-1)                   # [N, 256]; 128-aligned
    h = jnp.dot(cat, s1w_ref[...], preferred_element_type=f32) + s1b_ref[...]
    h = jnp.maximum(h, 0.0)                                    # [N, 128]

    # ---- SAGEConv 2 ----------------------------------------------------------
    agg = jnp.dot(a, h, preferred_element_type=f32)
    cat = jnp.concatenate([agg, h], axis=-1)                   # [N, 256]
    h = jnp.dot(cat, s2w_ref[...], preferred_element_type=f32) + s2b_ref[...]
    h = jnp.maximum(h, 0.0)                                    # [N, 128]

    # ---- readout MLP (lane-dense [N,128] output, sliced outside) ------------
    h = jnp.dot(h, rw1_ref[...], preferred_element_type=f32) + rb1_ref[...]
    h = jnp.maximum(h, 0.0)                                    # [N, 64]
    out = jnp.dot(h, rw2_ref[...], preferred_element_type=f32) + rb2_ref[...]
    o_ref[...] = out.astype(o_ref.dtype)                       # [N, 128] dense store


# ------------------------------ parameters -----------------------------------

def _linear_params(key, d_in, d_out):
    """PyTorch-style uniform(-1/sqrt(fan_in), 1/sqrt(fan_in)); stored as [d_in, d_out]."""
    kw, kb = jax.random.split(key)
    bound = 1.0 / jnp.sqrt(jnp.float32(d_in))
    w = jax.random.uniform(kw, (d_in, d_out), jnp.float32, -bound, bound)
    b = jax.random.uniform(kb, (d_out,), jnp.float32, -bound, bound)
    return w, b


def init_params(key):
    keys = jax.random.split(key, 8)
    p = {}
    p["enc_w1"], p["enc_b1"] = _linear_params(keys[0], INPUT_DIM1, HIDDEN_DIM1)
    p["enc_w2"], p["enc_b2"] = _linear_params(keys[1], HIDDEN_DIM1, OUTPUT_DIM1)
    p["s1_wl"], p["s1_bl"] = _linear_params(keys[2], INPUT_DIM2, HIDDEN_DIM2)
    p["s1_wr"], _ = _linear_params(keys[3], INPUT_DIM2, HIDDEN_DIM2)
    p["s2_wl"], p["s2_bl"] = _linear_params(keys[4], HIDDEN_DIM2, HIDDEN_DIM2)
    p["s2_wr"], _ = _linear_params(keys[5], HIDDEN_DIM2, HIDDEN_DIM2)
    p["ro_w1"], p["ro_b1"] = _linear_params(keys[6], HIDDEN_DIM2, READOUT_HID)
    p["ro_w2"], p["ro_b2"] = _linear_params(keys[7], READOUT_HID, OUTPUT_DIM2)
    return p


def _pad_to(arr, shape):
    return jnp.pad(arr, [(0, s - d) for d, s in zip(arr.shape, shape)])


def pack_params(p):
    """Zero-pad weights once so the kernel only ever sees 128-lane-aligned operands."""
    q = {}
    q["ew1"] = _pad_to(p["enc_w1"], (LANE, HIDDEN_DIM1))              # [128, 32]
    q["eb1"] = p["enc_b1"].reshape(1, -1)                              # [1, 32]
    q["ew2"] = _pad_to(p["enc_w2"], (HIDDEN_DIM1, LANE))               # [32, 128]
    q["eb2"] = _pad_to(p["enc_b2"].reshape(1, -1), (1, LANE))          # [1, 128]

    def sage_pack(wl, wr, bl):
        # single fused projection for [agg | x] (K = 2*LANE):
        #   rows 0:d_in = lin_l, rows LANE:LANE+d_in = lin_r, all other rows/cols zero.
        w = jnp.zeros((2 * LANE, LANE), jnp.float32)
        w = w.at[:wl.shape[0], :wl.shape[1]].set(wl)
        w = w.at[LANE:LANE + wr.shape[0], :wr.shape[1]].set(wr)
        b = _pad_to(bl.reshape(1, -1), (1, LANE))
        return w, b

    q["s1w"], q["s1b"] = sage_pack(p["s1_wl"], p["s1_wr"], p["s1_bl"])
    q["s2w"], q["s2b"] = sage_pack(p["s2_wl"], p["s2_wr"], p["s2_bl"])
    q["rw1"] = _pad_to(p["ro_w1"], (LANE, READOUT_HID))                # [128, 64]
    q["rb1"] = p["ro_b1"].reshape(1, -1)                               # [1, 64]
    q["rw2"] = _pad_to(p["ro_w2"], (READOUT_HID, LANE))                # [64, 128]
    q["rb2"] = _pad_to(p["ro_b2"].reshape(1, -1), (1, LANE))           # [1, 128]
    return q


# ------------------------------- forward -------------------------------------

def pgsage_forward(packed, x, edge_index):
    n = x.shape[0]

    # lane-pad node features to [N, 128] (lanes 44:128 = 0)
    x_pad = jnp.zeros((n, LANE), jnp.float32).at[:, :x.shape[1]].set(x)

    # row-normalized dense adjacency for mean aggregation (glue, plain JAX).
    # deg via bincount-style scatter-add of ones (counts duplicate edges, identical
    # to the previous dense row-sum).
    src = edge_index[0]
    dst = edge_index[1]
    adj = jnp.zeros((n, n), jnp.float32).at[dst, src].add(1.0)
    deg = jnp.zeros((n,), jnp.float32).at[dst].add(1.0)
    a_norm = adj / jnp.maximum(deg, 1.0)[:, None]

    flops = 2 * n * (LANE * HIDDEN_DIM1 + HIDDEN_DIM1 * LANE          # encoder
                     + 2 * (n * LANE + 2 * LANE * LANE)               # 2x fused SAGE
                     + LANE * READOUT_HID + READOUT_HID * LANE)       # readout
    bytes_accessed = 4 * (n * LANE + n * n
                          + sum(int(v.size) for v in packed.values())
                          + n * LANE)

    out_pad = pl.pallas_call(
        _fused_pgsage_kernel,
        out_shape=jax.ShapeDtypeStruct((n, LANE), jnp.float32),
        in_specs=[pl.BlockSpec(memory_space=pltpu.VMEM)] * 14,
        out_specs=pl.BlockSpec(memory_space=pltpu.VMEM),
        cost_estimate=pl.CostEstimate(flops=flops, transcendentals=0,
                                      bytes_accessed=bytes_accessed),
    )(x_pad, a_norm,
      packed["ew1"], packed["eb1"], packed["ew2"], packed["eb2"],
      packed["s1w"], packed["s1b"], packed["s2w"], packed["s2b"],
      packed["rw1"], packed["rb1"], packed["rw2"], packed["rb2"])

    return out_pad[:, :OUTPUT_DIM2]


# --------------------------- pure-JAX reference ------------------------------

def pgsage_reference(params, x, edge_index):
    n = x.shape[0]
    src, dst = edge_index[0], edge_index[1]
    adj = jnp.zeros((n, n), jnp.float32).at[dst, src].add(1.0)
    deg = jnp.zeros((n,), jnp.float32).at[dst].add(1.0)
    a_norm = adj / jnp.maximum(deg, 1.0)[:, None]

    with jax.default_matmul_precision("highest"):
        h = jnp.maximum(x[:, :INPUT_DIM1] @ params["enc_w1"] + params["enc_b1"], 0.0)
        h = jnp.maximum(h @ params["enc_w2"] + params["enc_b2"], 0.0)
        h = jnp.concatenate([h, x[:, INPUT_DIM1:]], axis=1)
        for wl, bl, wr in (("s1_wl", "s1_bl", "s1_wr"), ("s2_wl", "s2_bl", "s2_wr")):
            agg = a_norm @ h
            h = jnp.maximum(agg @ params[wl] + h @ params[wr] + params[bl], 0.0)
        h = jnp.maximum(h @ params["ro_w1"] + params["ro_b1"], 0.0)
        return h @ params["ro_w2"] + params["ro_b2"]


if __name__ == "__main__":
    key = jax.random.PRNGKey(0)
    k_param, k_x, k_e = jax.random.split(key, 3)

    N_NODES = 16
    N_EDGES = 40

    params = init_params(k_param)
    packed = pack_params(params)
    x = jax.random.normal(k_x, (N_NODES, INPUT_DIM1 + OUTPUT_DIM2), jnp.float32)  # [16, 44]
    edge_index = jax.random.randint(k_e, (2, N_EDGES), 0, N_NODES, jnp.int32)

    out = jax.jit(pgsage_forward)(packed, x, edge_index)
    jax.block_until_ready(out)

    assert out.shape == (N_NODES, OUTPUT_DIM2)
    assert out.dtype == jnp.float32

    ref = pgsage_reference(params, x, edge_index)
    assert bool(jnp.allclose(out, ref, rtol=1e-2, atol=1e-2)), "mismatch vs reference"

    print("KERNEL_OK")
</pallas_src>

<mosaic_0001>
module attributes {stable_mosaic.version = 11 : i64} {
  func.func @_fused_pgsage_kernel(%arg0: memref<16x128xf32, #tpu.memory_space<vmem>>, %arg1: memref<16x16xf32, #tpu.memory_space<vmem>>, %arg2: memref<128x32xf32, #tpu.memory_space<vmem>>, %arg3: memref<1x32xf32, #tpu.memory_space<vmem>>, %arg4: memref<32x128xf32, #tpu.memory_space<vmem>>, %arg5: memref<1x128xf32, #tpu.memory_space<vmem>>, %arg6: memref<256x128xf32, #tpu.memory_space<vmem>>, %arg7: memref<1x128xf32, #tpu.memory_space<vmem>>, %arg8: memref<256x128xf32, #tpu.memory_space<vmem>>, %arg9: memref<1x128xf32, #tpu.memory_space<vmem>>, %arg10: memref<128x64xf32, #tpu.memory_space<vmem>>, %arg11: memref<1x64xf32, #tpu.memory_space<vmem>>, %arg12: memref<64x128xf32, #tpu.memory_space<vmem>>, %arg13: memref<1x128xf32, #tpu.memory_space<vmem>>, %arg14: memref<16x128xf32, #tpu.memory_space<vmem>>) attributes {dimension_semantics = [], scalar_prefetch = 0 : i64, scratch_operands = 0 : i64, tpu.core_type = #tpu.core_type<tc>} {
    %c0 = arith.constant 0 : index
    %c0_0 = arith.constant 0 : index
    %0 = vector.load %arg0[%c0, %c0_0] : memref<16x128xf32, #tpu.memory_space<vmem>>, vector<16x128xf32>
    %c0_1 = arith.constant 0 : index
    %c0_2 = arith.constant 0 : index
    %1 = vector.load %arg1[%c0_1, %c0_2] : memref<16x16xf32, #tpu.memory_space<vmem>>, vector<16x16xf32>
    %c0_3 = arith.constant 0 : index
    %c0_4 = arith.constant 0 : index
    %2 = vector.load %arg2[%c0_3, %c0_4] : memref<128x32xf32, #tpu.memory_space<vmem>>, vector<128x32xf32>
    %cst = arith.constant dense<0.000000e+00> : vector<16x32xf32>
    %3 = tpu.matmul %0, %2, %cst {dimension_numbers = #tpu.dot_dimension_numbers<[1], [0], [0], [1], [0, 0, 1, 1], [], []>} : vector<16x128xf32>, vector<128x32xf32>, vector<16x32xf32> -> vector<16x32xf32>
    %c0_5 = arith.constant 0 : index
    %c0_6 = arith.constant 0 : index
    %4 = vector.load %arg3[%c0_5, %c0_6] : memref<1x32xf32, #tpu.memory_space<vmem>>, vector<1x32xf32>
    %5 = vector.broadcast %4 : vector<1x32xf32> to vector<16x32xf32>
    %6 = arith.addf %3, %5 : vector<16x32xf32>
    %cst_7 = arith.constant 0.000000e+00 : f32
    %7 = vector.broadcast %cst_7 : f32 to vector<16x32xf32>
    %8 = arith.maximumf %6, %7 : vector<16x32xf32>
    %c0_8 = arith.constant 0 : index
    %c0_9 = arith.constant 0 : index
    %9 = vector.load %arg4[%c0_8, %c0_9] : memref<32x128xf32, #tpu.memory_space<vmem>>, vector<32x128xf32>
    %cst_10 = arith.constant dense<0.000000e+00> : vector<16x128xf32>
    %10 = tpu.matmul %8, %9, %cst_10 {dimension_numbers = #tpu.dot_dimension_numbers<[1], [0], [0], [1], [0, 0, 1, 1], [], []>} : vector<16x32xf32>, vector<32x128xf32>, vector<16x128xf32> -> vector<16x128xf32>
    %c0_11 = arith.constant 0 : index
    %c0_12 = arith.constant 0 : index
    %11 = vector.load %arg5[%c0_11, %c0_12] : memref<1x128xf32, #tpu.memory_space<vmem>>, vector<1x128xf32>
    %12 = vector.broadcast %11 : vector<1x128xf32> to vector<16x128xf32>
    %13 = arith.addf %10, %12 : vector<16x128xf32>
    %cst_13 = arith.constant 0.000000e+00 : f32
    %14 = vector.broadcast %cst_13 : f32 to vector<16x128xf32>
    %15 = arith.maximumf %13, %14 : vector<16x128xf32>
    %16 = tpu.iota {dimensions = array<i32: 1>} : vector<16x128xi32>
    %c32_i32 = arith.constant 32 : i32
    %17 = vector.broadcast %c32_i32 : i32 to vector<16x128xi32>
    %18 = arith.cmpi sge, %16, %17 : vector<16x128xi32>
    %cst_14 = arith.constant 0.000000e+00 : f32
    %19 = vector.broadcast %cst_14 : f32 to vector<16x128xf32>
    %20 = arith.select %18, %0, %19 : vector<16x128xi1>, vector<16x128xf32>
    %21 = arith.addf %15, %20 : vector<16x128xf32>
    %cst_15 = arith.constant dense<0.000000e+00> : vector<16x128xf32>
    %22 = tpu.matmul %1, %21, %cst_15 {dimension_numbers = #tpu.dot_dimension_numbers<[1], [0], [0], [1], [0, 0, 1, 1], [], []>} : vector<16x16xf32>, vector<16x128xf32>, vector<16x128xf32> -> vector<16x128xf32>
    %23 = tpu.concatenate %22, %21 in 1 : vector<16x128xf32>, vector<16x128xf32> -> vector<16x256xf32>
    %c0_16 = arith.constant 0 : index
    %c0_17 = arith.constant 0 : index
    %24 = vector.load %arg6[%c0_16, %c0_17] : memref<256x128xf32, #tpu.memory_space<vmem>>, vector<256x128xf32>
    %cst_18 = arith.constant dense<0.000000e+00> : vector<16x128xf32>
    %25 = tpu.matmul %23, %24, %cst_18 {dimension_numbers = #tpu.dot_dimension_numbers<[1], [0], [0], [1], [0, 0, 1, 1], [], []>} : vector<16x256xf32>, vector<256x128xf32>, vector<16x128xf32> -> vector<16x128xf32>
    %c0_19 = arith.constant 0 : index
    %c0_20 = arith.constant 0 : index
    %26 = vector.load %arg7[%c0_19, %c0_20] : memref<1x128xf32, #tpu.memory_space<vmem>>, vector<1x128xf32>
    %27 = vector.broadcast %26 : vector<1x128xf32> to vector<16x128xf32>
    %28 = arith.addf %25, %27 : vector<16x128xf32>
    %cst_21 = arith.constant 0.000000e+00 : f32
    %29 = vector.broadcast %cst_21 : f32 to vector<16x128xf32>
    %30 = arith.maximumf %28, %29 : vector<16x128xf32>
    %cst_22 = arith.constant dense<0.000000e+00> : vector<16x128xf32>
    %31 = tpu.matmul %1, %30, %cst_22 {dimension_numbers = #tpu.dot_dimension_numbers<[1], [0], [0], [1], [0, 0, 1, 1], [], []>} : vector<16x16xf32>, vector<16x128xf32>, vector<16x128xf32> -> vector<16x128xf32>
    %32 = tpu.concatenate %31, %30 in 1 : vector<16x128xf32>, vector<16x128xf32> -> vector<16x256xf32>
    %c0_23 = arith.constant 0 : index
    %c0_24 = arith.constant 0 : index
    %33 = vector.load %arg8[%c0_23, %c0_24] : memref<256x128xf32, #tpu.memory_space<vmem>>, vector<256x128xf32>
    %cst_25 = arith.constant dense<0.000000e+00> : vector<16x128xf32>
    %34 = tpu.matmul %32, %33, %cst_25 {dimension_numbers = #tpu.dot_dimension_numbers<[1], [0], [0], [1], [0, 0, 1, 1], [], []>} : vector<16x256xf32>, vector<256x128xf32>, vector<16x128xf32> -> vector<16x128xf32>
    %c0_26 = arith.constant 0 : index
    %c0_27 = arith.constant 0 : index
    %35 = vector.load %arg9[%c0_26, %c0_27] : memref<1x128xf32, #tpu.memory_space<vmem>>, vector<1x128xf32>
    %36 = vector.broadcast %35 : vector<1x128xf32> to vector<16x128xf32>
    %37 = arith.addf %34, %36 : vector<16x128xf32>
    %cst_28 = arith.constant 0.000000e+00 : f32
    %38 = vector.broadcast %cst_28 : f32 to vector<16x128xf32>
    %39 = arith.maximumf %37, %38 : vector<16x128xf32>
    %c0_29 = arith.constant 0 : index
    %c0_30 = arith.constant 0 : index
    %40 = vector.load %arg10[%c0_29, %c0_30] : memref<128x64xf32, #tpu.memory_space<vmem>>, vector<128x64xf32>
    %cst_31 = arith.constant dense<0.000000e+00> : vector<16x64xf32>
    %41 = tpu.matmul %39, %40, %cst_31 {dimension_numbers = #tpu.dot_dimension_numbers<[1], [0], [0], [1], [0, 0, 1, 1], [], []>} : vector<16x128xf32>, vector<128x64xf32>, vector<16x64xf32> -> vector<16x64xf32>
    %c0_32 = arith.constant 0 : index
    %c0_33 = arith.constant 0 : index
    %42 = vector.load %arg11[%c0_32, %c0_33] : memref<1x64xf32, #tpu.memory_space<vmem>>, vector<1x64xf32>
    %43 = vector.broadcast %42 : vector<1x64xf32> to vector<16x64xf32>
    %44 = arith.addf %41, %43 : vector<16x64xf32>
    %cst_34 = arith.constant 0.000000e+00 : f32
    %45 = vector.broadcast %cst_34 : f32 to vector<16x64xf32>
    %46 = arith.maximumf %44, %45 : vector<16x64xf32>
    %c0_35 = arith.constant 0 : index
    %c0_36 = arith.constant 0 : index
    %47 = vector.load %arg12[%c0_35, %c0_36] : memref<64x128xf32, #tpu.memory_space<vmem>>, vector<64x128xf32>
    %cst_37 = arith.constant dense<0.000000e+00> : vector<16x128xf32>
    %48 = tpu.matmul %46, %47, %cst_37 {dimension_numbers = #tpu.dot_dimension_numbers<[1], [0], [0], [1], [0, 0, 1, 1], [], []>} : vector<16x64xf32>, vector<64x128xf32>, vector<16x128xf32> -> vector<16x128xf32>
    %c0_38 = arith.constant 0 : index
    %c0_39 = arith.constant 0 : index
    %49 = vector.load %arg13[%c0_38, %c0_39] : memref<1x128xf32, #tpu.memory_space<vmem>>, vector<1x128xf32>
    %50 = vector.broadcast %49 : vector<1x128xf32> to vector<16x128xf32>
    %51 = arith.addf %48, %50 : vector<16x128xf32>
    %c0_40 = arith.constant 0 : index
    %c0_41 = arith.constant 0 : index
    %52 = vector.load %arg14[%c0_40, %c0_41] : memref<16x128xf32, #tpu.memory_space<vmem>>, vector<16x128xf32>
    tpu.vector_store %arg14[%c0_40, %c0_41], %51 {strides = array<i32>} : memref<16x128xf32, #tpu.memory_space<vmem>>, vector<16x128xf32>,
    return
  }
}

</mosaic_0001>

<llo_original>
// kernel: pgsage_forward.1
$region0: #{pgsage_forward.1}
  #allocation0 [shape = 'u32[]', space=smem, size = 0x4, offset = 0x4, fixed_abs, tag = 'smem constant byte address 0x4 - core index']
  #allocation1 [shape = 'u32[72,128]{1,0:T(1,128)}', space=vmem, size = 0x9000, scoped, tag = 'internal scratch']
  %s0 = inlined_call_operand.vmem [shape: f32[16,128], index: 0, kind: input, shape index: {}]
  %s1 = inlined_call_operand.vmem [shape: f32[16,16], index: 1, kind: input, shape index: {}]
  %s2 = inlined_call_operand.vmem [shape: f32[128,32], index: 2, kind: input, shape index: {}]
  %s3 = inlined_call_operand.vmem [shape: f32[1,32], index: 3, kind: input, shape index: {}]
  %s4 = inlined_call_operand.vmem [shape: f32[32,128], index: 4, kind: input, shape index: {}]
  %s5 = inlined_call_operand.vmem [shape: f32[1,128], index: 5, kind: input, shape index: {}]
  %s6 = inlined_call_operand.vmem [shape: f32[256,128], index: 6, kind: input, shape index: {}]
  %s7 = inlined_call_operand.vmem [shape: f32[1,128], index: 7, kind: input, shape index: {}]
  %s8 = inlined_call_operand.vmem [shape: f32[256,128], index: 8, kind: input, shape index: {}]
  %s9 = inlined_call_operand.vmem [shape: f32[1,128], index: 9, kind: input, shape index: {}]
  %s10 = inlined_call_operand.vmem [shape: f32[128,64], index: 10, kind: input, shape index: {}]
  %s11 = inlined_call_operand.vmem [shape: f32[1,64], index: 11, kind: input, shape index: {}]
  %s12 = inlined_call_operand.vmem [shape: f32[64,128], index: 12, kind: input, shape index: {}]
  %s13 = inlined_call_operand.vmem [shape: f32[1,128], index: 13, kind: input, shape index: {}]
  %s14 = inlined_call_operand.hbm [shape: f32[16,128], index: 14, kind: output, shape index: {}]
  %s15 = sld [smem:[#allocation0]]
  $region66: #{pgsage_forward.1} parent=0
    _
  %s17 = ssub.s32 1, %s15
  %s18 = scalar_select 0, %s17, %s15
  $region1: #{pgsage_forward.1} parent=0
    #allocation2 [shape = 'u8[8192]{0}', space=vmem, size = 0x2000, scoped, tag = 'output window, operand 0, single buffered']
    #allocation3 [shape = 's32[1]{0}', space=sflag, size = 0x4, scoped, tag = 'scoped memory for pgsage_forward.1']
    %19 = vsyncpa [#allocation3], 0
    // Predicated region
    $region2: #{pgsage_forward.1} parent=1 // pred_check
      _
    $region3: #{pgsage_forward.1} parent=1 // pred_check_branch
      %21 = sbr.rel (0) target = $region5
    $region4: #{pgsage_forward.1} parent=1 // pred_region
      _
    $region5: #{pgsage_forward.1} parent=1 // pred_fallthru
      _
    // Predicated region
    $region6: #{pgsage_forward.1} parent=1 // pred_check
      _
    $region7: #{pgsage_forward.1} parent=1 // pred_check_branch
      %23 = sbr.rel (0) target = $region9
    $region8: #{pgsage_forward.1} parent=1 // pred_region
      _
    $region9: #{pgsage_forward.1} parent=1 // pred_fallthru
      _
    // Predicated region
    $region10: #{pgsage_forward.1} parent=1 // pred_check
      _
    $region11: #{pgsage_forward.1} parent=1 // pred_check_branch
      %25 = sbr.rel (0) target = $region13
    $region12: #{pgsage_forward.1} parent=1 // pred_region
      _
    $region13: #{pgsage_forward.1} parent=1 // pred_fallthru
      _
    // Predicated region
    $region14: #{pgsage_forward.1} parent=1 // pred_check
      _
    $region15: #{pgsage_forward.1} parent=1 // pred_check_branch
      %27 = sbr.rel (0) target = $region17
    $region16: #{pgsage_forward.1} parent=1 // pred_region
      _
    $region17: #{pgsage_forward.1} parent=1 // pred_fallthru
      _
    // Predicated region
    $region18: #{pgsage_forward.1} parent=1 // pred_check
      _
    $region19: #{pgsage_forward.1} parent=1 // pred_check_branch
      %29 = sbr.rel (0) target = $region21
    $region20: #{pgsage_forward.1} parent=1 // pred_region
      _
    $region21: #{pgsage_forward.1} parent=1 // pred_fallthru
      _
    // Predicated region
    $region22: #{pgsage_forward.1} parent=1 // pred_check
      _
    $region23: #{pgsage_forward.1} parent=1 // pred_check_branch
      %31 = sbr.rel (0) target = $region25
    $region24: #{pgsage_forward.1} parent=1 // pred_region
      _
    $region25: #{pgsage_forward.1} parent=1 // pred_fallthru
      _
    // Predicated region
    $region26: #{pgsage_forward.1} parent=1 // pred_check
      _
    $region27: #{pgsage_forward.1} parent=1 // pred_check_branch
      %33 = sbr.rel (0) target = $region29
    $region28: #{pgsage_forward.1} parent=1 // pred_region
      _
    $region29: #{pgsage_forward.1} parent=1 // pred_fallthru
      _
    // Predicated region
    $region30: #{pgsage_forward.1} parent=1 // pred_check
      _
    $region31: #{pgsage_forward.1} parent=1 // pred_check_branch
      %35 = sbr.rel (0) target = $region33
    $region32: #{pgsage_forward.1} parent=1 // pred_region
      _
    $region33: #{pgsage_forward.1} parent=1 // pred_fallthru
      _
    // Predicated region
    $region34: #{pgsage_forward.1} parent=1 // pred_check
      _
    $region35: #{pgsage_forward.1} parent=1 // pred_check_branch
      %37 = sbr.rel (0) target = $region37
    $region36: #{pgsage_forward.1} parent=1 // pred_region
      _
    $region37: #{pgsage_forward.1} parent=1 // pred_fallthru
      _
    // Predicated region
    $region38: #{pgsage_forward.1} parent=1 // pred_check
      _
    $region39: #{pgsage_forward.1} parent=1 // pred_check_branch
      %39 = sbr.rel (0) target = $region41
    $region40: #{pgsage_forward.1} parent=1 // pred_region
      _
    $region41: #{pgsage_forward.1} parent=1 // pred_fallthru
      _
    // Predicated region
    $region42: #{pgsage_forward.1} parent=1 // pred_check
      _
    $region43: #{pgsage_forward.1} parent=1 // pred_check_branch
      %41 = sbr.rel (0) target = $region45
    $region44: #{pgsage_forward.1} parent=1 // pred_region
      _
    $region45: #{pgsage_forward.1} parent=1 // pred_fallthru
      _
    // Predicated region
    $region46: #{pgsage_forward.1} parent=1 // pred_check
      _
    $region47: #{pgsage_forward.1} parent=1 // pred_check_branch
      %43 = sbr.rel (0) target = $region49
    $region48: #{pgsage_forward.1} parent=1 // pred_region
      _
    $region49: #{pgsage_forward.1} parent=1 // pred_fallthru
      _
    // Predicated region
    $region50: #{pgsage_forward.1} parent=1 // pred_check
      _
    $region51: #{pgsage_forward.1} parent=1 // pred_check_branch
      %45 = sbr.rel (0) target = $region53
    $region52: #{pgsage_forward.1} parent=1 // pred_region
      _
    $region53: #{pgsage_forward.1} parent=1 // pred_fallthru
      _
    // Predicated region
    $region54: #{pgsage_forward.1} parent=1 // pred_check
      _
    $region55: #{pgsage_forward.1} parent=1 // pred_check_branch
      %47 = sbr.rel (0) target = $region57
    $region56: #{pgsage_forward.1} parent=1 // pred_region
      _
    $region57: #{pgsage_forward.1} parent=1 // pred_fallthru
      _
    %v48 = vld [vmem:[%s0] sm:$0xff]
    %v49 = vld [vmem:[%s0 + $0x8] sm:$0xff]
    %v50 = vld [vmem:[%s1] sm:$0xff]
    %v51 = vld [vmem:[%s1 + $0x8] sm:$0xff]
    %v52 = vld [vmem:[%s2] sm:$0xff]
    %v53 = vld [vmem:[%s2 + $0x8] sm:$0xff]
    %v54 = vld [vmem:[%s2 + $0x10] sm:$0xff]
    %v55 = vld [vmem:[%s2 + $0x18] sm:$0xff]
    %v56 = vld [vmem:[%s2 + $0x20] sm:$0xff]
    %v57 = vld [vmem:[%s2 + $0x28] sm:$0xff]
    %v58 = vld [vmem:[%s2 + $0x30] sm:$0xff]
    %v59 = vld [vmem:[%s2 + $0x38] sm:$0xff]
    %v60 = vld [vmem:[%s2 + $0x40] sm:$0xff]
    %v61 = vld [vmem:[%s2 + $0x48] sm:$0xff]
    %v62 = vld [vmem:[%s2 + $0x50] sm:$0xff]
    %v63 = vld [vmem:[%s2 + $0x58] sm:$0xff]
    %v64 = vld [vmem:[%s2 + $0x60] sm:$0xff]
    %v65 = vld [vmem:[%s2 + $0x68] sm:$0xff]
    %v66 = vld [vmem:[%s2 + $0x70] sm:$0xff]
    %v67 = vld [vmem:[%s2 + $0x78] sm:$0xff]
    %v68 = vld [vmem:[%s3] sm:$0x1]
    %v70 = vperm.slane %v68, 0
    %72 = vmatpush.msra.mxu0 %v67
    %73 = vmatpush.msra.mxu0 %v66
    %74 = vmatpush.msra.mxu0 %v65
    %75 = vmatpush.msra.mxu0 %v64
    %76 = vmatpush.msra.mxu0 %v63
    %77 = vmatpush.msra.mxu0 %v62
    %78 = vmatpush.msra.mxu0 %v61
    %79 = vmatpush.msra.mxu0 %v60
    %80 = vmatpush.msra.mxu0 %v59
    %81 = vmatpush.msra.mxu0 %v58
    %82 = vmatpush.msra.mxu0 %v57
    %83 = vmatpush.msra.mxu0 %v56
    %84 = vmatpush.msra.mxu0 %v55
    %85 = vmatpush.msra.mxu0 %v54
    %86 = vmatpush.msra.mxu0 %v53
    %87 = vmatpush.msra.mxu0 %v52
    %88 = vmatmul.f32.gmra.mxu0 %v48
    %v89 = vpop.f32.mrf.mxu0
    %v90 = vadd.f32 %v70, %v89
    %91 = vmatmul.f32.gmra.mxu0 %v49
    %v92 = vpop.f32.mrf.mxu0
    %v93 = vadd.f32 %v70, %v92
    %94 = vdwg.mxu0
    %v95 = vmax.f32 %v90, 0.0
    %v96 = vmax.f32 %v93, 0.0
    %v97 = vld [vmem:[%s4] sm:$0xff]
    %v98 = vld [vmem:[%s4 + $0x8] sm:$0xff]
    %v99 = vld [vmem:[%s4 + $0x10] sm:$0xff]
    %v100 = vld [vmem:[%s4 + $0x18] sm:$0xff]
    %v101 = vld [vmem:[%s5] sm:$0x1]
    %v103 = vperm.slane %v101, 0
    %vm105 = vcmask 261120
    %v107 = vsel %vm105, %v95, 0
    %v110 = vsel %vm105, %v96, 0
    %112 = vmatpush.msra.mxu0 0.0
    %113 = vmatpush.msra.mxu0 0.0
    %114 = vmatpush.msra.mxu0 0.0
    %115 = vmatpush.msra.mxu0 0.0
    %116 = vmatpush.msra.mxu0 0.0
    %117 = vmatpush.msra.mxu0 0.0
    %118 = vmatpush.msra.mxu0 0.0
    %119 = vmatpush.msra.mxu0 0.0
    %120 = vmatpush.msra.mxu0 0.0
    %121 = vmatpush.msra.mxu0 0.0
    %122 = vmatpush.msra.mxu0 0.0
    %123 = vmatpush.msra.mxu0 0.0
    %124 = vmatpush.msra.mxu0 %v100
    %125 = vmatpush.msra.mxu0 %v99
    %126 = vmatpush.msra.mxu0 %v98
    %127 = vmatpush.msra.mxu0 %v97
    %128 = vmatmul.f32.gmra.mxu0 %v107
    %v129 = vpop.f32.mrf.mxu0
    %v130 = vadd.f32 %v103, %v129
    %131 = vmatmul.f32.gmra.mxu0 %v110
    %v132 = vpop.f32.mrf.mxu0
    %v133 = vadd.f32 %v103, %v132
    %134 = vdwg.mxu0
    %v135 = vmax.f32 %v130, 0.0
    %v136 = vmax.f32 %v133, 0.0
    %v137 = vlaneseq
    %v138 = vand.u32 %v137, 127
    %vm139 = vcmp.ge.s32.totalorder %v138, 32
    %v140 = vsel %vm139, %v48, 0.0
    %v141 = vsel %vm139, %v49, 0.0
    %v142 = vadd.f32 %v135, %v140
    %v143 = vadd.f32 %v136, %v141
    %vm144 = vcmask 130048
    %v146 = vsel %vm144, %v50, 0
    %v149 = vsel %vm144, %v51, 0
    %151 = vmatpush.msra.mxu0 0.0
    %152 = vmatpush.msra.mxu0 0.0
    %153 = vmatpush.msra.mxu0 0.0
    %154 = vmatpush.msra.mxu0 0.0
    %155 = vmatpush.msra.mxu0 0.0
    %156 = vmatpush.msra.mxu0 0.0
    %157 = vmatpush.msra.mxu0 0.0
    %158 = vmatpush.msra.mxu0 0.0
    %159 = vmatpush.msra.mxu0 0.0
    %160 = vmatpush.msra.mxu0 0.0
    %161 = vmatpush.msra.mxu0 0.0
    %162 = vmatpush.msra.mxu0 0.0
    %163 = vmatpush.msra.mxu0 0.0
    %164 = vmatpush.msra.mxu0 0.0
    %165 = vmatpush.msra.mxu0 %v143
    %166 = vmatpush.msra.mxu0 %v142
    %167 = vmatmul.f32.gmra.mxu0 %v146
    %v168 = vpop.f32.mrf.mxu0
    %v169 = vadd.f32 0.0, %v168
    %170 = vmatmul.f32.gmra.mxu0 %v149
    %v171 = vpop.f32.mrf.mxu0
    %v172 = vadd.f32 0.0, %v171
    %173 = vdwg.mxu0
    %v174 = vld [vmem:[%s6] sm:$0xff]
    %v175 = vld [vmem:[%s6 + $0x8] sm:$0xff]
    %v176 = vld [vmem:[%s6 + $0x10] sm:$0xff]
    %v177 = vld [vmem:[%s6 + $0x18] sm:$0xff]
    %v178 = vld [vmem:[%s6 + $0x20] sm:$0xff]
    %v179 = vld [vmem:[%s6 + $0x28] sm:$0xff]
    %v180 = vld [vmem:[%s6 + $0x30] sm:$0xff]
    %v181 = vld [vmem:[%s6 + $0x38] sm:$0xff]
    %v182 = vld [vmem:[%s6 + $0x40] sm:$0xff]
    %v183 = vld [vmem:[%s6 + $0x48] sm:$0xff]
    %v184 = vld [vmem:[%s6 + $0x50] sm:$0xff]
    %v185 = vld [vmem:[%s6 + $0x58] sm:$0xff]
    %v186 = vld [vmem:[%s6 + $0x60] sm:$0xff]
    %v187 = vld [vmem:[%s6 + $0x68] sm:$0xff]
    %v188 = vld [vmem:[%s6 + $0x70] sm:$0xff]
    %v189 = vld [vmem:[%s6 + $0x78] sm:$0xff]
    %v190 = vld [vmem:[%s6 + $0x80] sm:$0xff]
    %v191 = vld [vmem:[%s6 + $0x88] sm:$0xff]
    %v192 = vld [vmem:[%s6 + $0x90] sm:$0xff]
    %v193 = vld [vmem:[%s6 + $0x98] sm:$0xff]
    %v194 = vld [vmem:[%s6 + $0xa0] sm:$0xff]
    %v195 = vld [vmem:[%s6 + $0xa8] sm:$0xff]
    %v196 = vld [vmem:[%s6 + $0xb0] sm:$0xff]
    %v197 = vld [vmem:[%s6 + $0xb8] sm:$0xff]
    %v198 = vld [vmem:[%s6 + $0xc0] sm:$0xff]
    %v199 = vld [vmem:[%s6 + $0xc8] sm:$0xff]
    %v200 = vld [vmem:[%s6 + $0xd0] sm:$0xff]
    %v201 = vld [vmem:[%s6 + $0xd8] sm:$0xff]
    %v202 = vld [vmem:[%s6 + $0xe0] sm:$0xff]
    %v203 = vld [vmem:[%s6 + $0xe8] sm:$0xff]
    %v204 = vld [vmem:[%s6 + $0xf0] sm:$0xff]
    %v205 = vld [vmem:[%s6 + $0xf8] sm:$0xff]
    %v206 = vld [vmem:[%s7] sm:$0x1]
    %v208 = vperm.slane %v206, 0
    %210 = vmatpush.msra.mxu0 %v189
    %211 = vmatpush.msra.mxu0 %v188
    %212 = vmatpush.msra.mxu0 %v187
    %213 = vmatpush.msra.mxu0 %v186
    %214 = vmatpush.msra.mxu0 %v185
    %215 = vmatpush.msra.mxu0 %v184
    %216 = vmatpush.msra.mxu0 %v183
    %217 = vmatpush.msra.mxu0 %v182
    %218 = vmatpush.msra.mxu0 %v181
    %219 = vmatpush.msra.mxu0 %v180
    %220 = vmatpush.msra.mxu0 %v179
    %221 = vmatpush.msra.mxu0 %v178
    %222 = vmatpush.msra.mxu0 %v177
    %223 = vmatpush.msra.mxu0 %v176
    %224 = vmatpush.msra.mxu0 %v175
    %225 = vmatpush.msra.mxu0 %v174
    %226 = vmatmul.f32.gmra.mxu0 %v169
    %v227 = vpop.f32.mrf.mxu0
    %v228 = vadd.f32 %v208, %v227
    %229 = vmatmul.f32.gmra.mxu0 %v172
    %v230 = vpop.f32.mrf.mxu0
    %v231 = vadd.f32 %v208, %v230
    %232 = vdwg.mxu0
    %233 = vmatpush.msra.mxu0 %v205
    %234 = vmatpush.msra.mxu0 %v204
    %235 = vmatpush.msra.mxu0 %v203
    %236 = vmatpush.msra.mxu0 %v202
    %237 = vmatpush.msra.mxu0 %v201
    %238 = vmatpush.msra.mxu0 %v200
    %239 = vmatpush.msra.mxu0 %v199
    %240 = vmatpush.msra.mxu0 %v198
    %241 = vmatpush.msra.mxu0 %v197
    %242 = vmatpush.msra.mxu0 %v196
    %243 = vmatpush.msra.mxu0 %v195
    %244 = vmatpush.msra.mxu0 %v194
    %245 = vmatpush.msra.mxu0 %v193
    %246 = vmatpush.msra.mxu0 %v192
    %247 = vmatpush.msra.mxu0 %v191
    %248 = vmatpush.msra.mxu0 %v190
    %249 = vmatmul.f32.gmra.mxu0 %v142
    %v250 = vpop.f32.mrf.mxu0
    %v251 = vadd.f32 %v228, %v250
    %252 = vmatmul.f32.gmra.mxu0 %v143
    %v253 = vpop.f32.mrf.mxu0
    %v254 = vadd.f32 %v231, %v253
    %255 = vdwg.mxu0
    %v256 = vmax.f32 %v251, 0.0
    %v257 = vmax.f32 %v254, 0.0
    %258 = vmatpush.msra.mxu0 0.0
    %259 = vmatpush.msra.mxu0 0.0
    %260 = vmatpush.msra.mxu0 0.0
    %261 = vmatpush.msra.mxu0 0.0
    %262 = vmatpush.msra.mxu0 0.0
    %263 = vmatpush.msra.mxu0 0.0
    %264 = vmatpush.msra.mxu0 0.0
    %265 = vmatpush.msra.mxu0 0.0
    %266 = vmatpush.msra.mxu0 0.0
    %267 = vmatpush.msra.mxu0 0.0
    %268 = vmatpush.msra.mxu0 0.0
    %269 = vmatpush.msra.mxu0 0.0
    %270 = vmatpush.msra.mxu0 0.0
    %271 = vmatpush.msra.mxu0 0.0
    %272 = vmatpush.msra.mxu0 %v257
    %273 = vmatpush.msra.mxu0 %v256
    %274 = vmatmul.f32.gmra.mxu0 %v146
    %v275 = vpop.f32.mrf.mxu0
    %v276 = vadd.f32 0.0, %v275
    %277 = vmatmul.f32.gmra.mxu0 %v149
    %v278 = vpop.f32.mrf.mxu0
    %v279 = vadd.f32 0.0, %v278
    %280 = vdwg.mxu0
    %v281 = vld [vmem:[%s8] sm:$0xff]
    %v282 = vld [vmem:[%s8 + $0x8] sm:$0xff]
    %v283 = vld [vmem:[%s8 + $0x10] sm:$0xff]
    %v284 = vld [vmem:[%s8 + $0x18] sm:$0xff]
    %v285 = vld [vmem:[%s8 + $0x20] sm:$0xff]
    %v286 = vld [vmem:[%s8 + $0x28] sm:$0xff]
    %v287 = vld [vmem:[%s8 + $0x30] sm:$0xff]
    %v288 = vld [vmem:[%s8 + $0x38] sm:$0xff]
    %v289 = vld [vmem:[%s8 + $0x40] sm:$0xff]
    %v290 = vld [vmem:[%s8 + $0x48] sm:$0xff]
    %v291 = vld [vmem:[%s8 + $0x50] sm:$0xff]
    %v292 = vld [vmem:[%s8 + $0x58] sm:$0xff]
    %v293 = vld [vmem:[%s8 + $0x60] sm:$0xff]
    %v294 = vld [vmem:[%s8 + $0x68] sm:$0xff]
    %v295 = vld [vmem:[%s8 + $0x70] sm:$0xff]
    %v296 = vld [vmem:[%s8 + $0x78] sm:$0xff]
    %v297 = vld [vmem:[%s8 + $0x80] sm:$0xff]
    %v298 = vld [vmem:[%s8 + $0x88] sm:$0xff]
    %v299 = vld [vmem:[%s8 + $0x90] sm:$0xff]
    %v300 = vld [vmem:[%s8 + $0x98] sm:$0xff]
    %v301 = vld [vmem:[%s8 + $0xa0] sm:$0xff]
    %v302 = vld [vmem:[%s8 + $0xa8] sm:$0xff]
    %v303 = vld [vmem:[%s8 + $0xb0] sm:$0xff]
    %v304 = vld [vmem:[%s8 + $0xb8] sm:$0xff]
    %v305 = vld [vmem:[%s8 + $0xc0] sm:$0xff]
    %v306 = vld [vmem:[%s8 + $0xc8] sm:$0xff]
    %v307 = vld [vmem:[%s8 + $0xd0] sm:$0xff]
    %v308 = vld [vmem:[%s8 + $0xd8] sm:$0xff]
    %v309 = vld [vmem:[%s8 + $0xe0] sm:$0xff]
    %v310 = vld [vmem:[%s8 + $0xe8] sm:$0xff]
    %v311 = vld [vmem:[%s8 + $0xf0] sm:$0xff]
    %v312 = vld [vmem:[%s8 + $0xf8] sm:$0xff]
    %v313 = vld [vmem:[%s9] sm:$0x1]
    %v315 = vperm.slane %v313, 0
    %317 = vmatpush.msra.mxu0 %v296
    %318 = vmatpush.msra.mxu0 %v295
    %319 = vmatpush.msra.mxu0 %v294
    %320 = vmatpush.msra.mxu0 %v293
    %321 = vmatpush.msra.mxu0 %v292
    %322 = vmatpush.msra.mxu0 %v291
    %323 = vmatpush.msra.mxu0 %v290
    %324 = vmatpush.msra.mxu0 %v289
    %325 = vmatpush.msra.mxu0 %v288
    %326 = vmatpush.msra.mxu0 %v287
    %327 = vmatpush.msra.mxu0 %v286
    %328 = vmatpush.msra.mxu0 %v285
    %329 = vmatpush.msra.mxu0 %v284
    %330 = vmatpush.msra.mxu0 %v283
    %331 = vmatpush.msra.mxu0 %v282
    %332 = vmatpush.msra.mxu0 %v281
    %333 = vmatmul.f32.gmra.mxu0 %v276
    %v334 = vpop.f32.mrf.mxu0
    %v335 = vadd.f32 %v315, %v334
    %336 = vmatmul.f32.gmra.mxu0 %v279
    %v337 = vpop.f32.mrf.mxu0
    %v338 = vadd.f32 %v315, %v337
    %339 = vdwg.mxu0
    %340 = vmatpush.msra.mxu0 %v312
    %341 = vmatpush.msra.mxu0 %v311
    %342 = vmatpush.msra.mxu0 %v310
    %343 = vmatpush.msra.mxu0 %v309
    %344 = vmatpush.msra.mxu0 %v308
    %345 = vmatpush.msra.mxu0 %v307
    %346 = vmatpush.msra.mxu0 %v306
    %347 = vmatpush.msra.mxu0 %v305
    %348 = vmatpush.msra.mxu0 %v304
    %349 = vmatpush.msra.mxu0 %v303
    %350 = vmatpush.msra.mxu0 %v302
    %351 = vmatpush.msra.mxu0 %v301
    %352 = vmatpush.msra.mxu0 %v300
    %353 = vmatpush.msra.mxu0 %v299
    %354 = vmatpush.msra.mxu0 %v298
    %355 = vmatpush.msra.mxu0 %v297
    %356 = vmatmul.f32.gmra.mxu0 %v256
    %v357 = vpop.f32.mrf.mxu0
    %v358 = vadd.f32 %v335, %v357
    %359 = vmatmul.f32.gmra.mxu0 %v257
    %v360 = vpop.f32.mrf.mxu0
    %v361 = vadd.f32 %v338, %v360
    %362 = vdwg.mxu0
    %v363 = vmax.f32 %v358, 0.0
    %v364 = vmax.f32 %v361, 0.0
    %v365 = vld [vmem:[%s10] sm:$0xff]
    %v366 = vld [vmem:[%s10 + $0x8] sm:$0xff]
    %v367 = vld [vmem:[%s10 + $0x10] sm:$0xff]
    %v368 = vld [vmem:[%s10 + $0x18] sm:$0xff]
    %v369 = vld [vmem:[%s10 + $0x20] sm:$0xff]
    %v370 = vld [vmem:[%s10 + $0x28] sm:$0xff]
    %v371 = vld [vmem:[%s10 + $0x30] sm:$0xff]
    %v372 = vld [vmem:[%s10 + $0x38] sm:$0xff]
    %v373 = vld [vmem:[%s10 + $0x40] sm:$0xff]
    %v374 = vld [vmem:[%s10 + $0x48] sm:$0xff]
    %v375 = vld [vmem:[%s10 + $0x50] sm:$0xff]
    %v376 = vld [vmem:[%s10 + $0x58] sm:$0xff]
    %v377 = vld [vmem:[%s10 + $0x60] sm:$0xff]
    %v378 = vld [vmem:[%s10 + $0x68] sm:$0xff]
    %v379 = vld [vmem:[%s10 + $0x70] sm:$0xff]
    %v380 = vld [vmem:[%s10 + $0x78] sm:$0xff]
    %v381 = vld [vmem:[%s11] sm:$0x1]
    %v383 = vperm.slane %v381, 0
    %385 = vmatpush.msra.mxu0 %v380
    %386 = vmatpush.msra.mxu0 %v379
    %387 = vmatpush.msra.mxu0 %v378
    %388 = vmatpush.msra.mxu0 %v377
    %389 = vmatpush.msra.mxu0 %v376
    %390 = vmatpush.msra.mxu0 %v375
    %391 = vmatpush.msra.mxu0 %v374
    %392 = vmatpush.msra.mxu0 %v373
    %393 = vmatpush.msra.mxu0 %v372
    %394 = vmatpush.msra.mxu0 %v371
    %395 = vmatpush.msra.mxu0 %v370
    %396 = vmatpush.msra.mxu0 %v369
    %397 = vmatpush.msra.mxu0 %v368
    %398 = vmatpush.msra.mxu0 %v367
    %399 = vmatpush.msra.mxu0 %v366
    %400 = vmatpush.msra.mxu0 %v365
    %401 = vmatmul.f32.gmra.mxu0 %v363
    %v402 = vpop.f32.mrf.mxu0
    %v403 = vadd.f32 %v383, %v402
    %404 = vmatmul.f32.gmra.mxu0 %v364
    %v405 = vpop.f32.mrf.mxu0
    %v406 = vadd.f32 %v383, %v405
    %407 = vdwg.mxu0
    %v408 = vmax.f32 %v403, 0.0
    %v409 = vmax.f32 %v406, 0.0
    %v410 = vld [vmem:[%s12] sm:$0xff]
    %v411 = vld [vmem:[%s12 + $0x8] sm:$0xff]
    %v412 = vld [vmem:[%s12 + $0x10] sm:$0xff]
    %v413 = vld [vmem:[%s12 + $0x18] sm:$0xff]
    %v414 = vld [vmem:[%s12 + $0x20] sm:$0xff]
    %v415 = vld [vmem:[%s12 + $0x28] sm:$0xff]
    %v416 = vld [vmem:[%s12 + $0x30] sm:$0xff]
    %v417 = vld [vmem:[%s12 + $0x38] sm:$0xff]
    %v418 = vld [vmem:[%s13] sm:$0x1]
    %v420 = vperm.slane %v418, 0
    %vm422 = vcmask 523264
    %v424 = vsel %vm422, %v408, 0
    %v427 = vsel %vm422, %v409, 0
    %429 = vmatpush.msra.mxu0 0.0
    %430 = vmatpush.msra.mxu0 0.0
    %431 = vmatpush.msra.mxu0 0.0
    %432 = vmatpush.msra.mxu0 0.0
    %433 = vmatpush.msra.mxu0 0.0
    %434 = vmatpush.msra.mxu0 0.0
    %435 = vmatpush.msra.mxu0 0.0
    %436 = vmatpush.msra.mxu0 0.0
    %437 = vmatpush.msra.mxu0 %v417
    %438 = vmatpush.msra.mxu0 %v416
    %439 = vmatpush.msra.mxu0 %v415
    %440 = vmatpush.msra.mxu0 %v414
    %441 = vmatpush.msra.mxu0 %v413
    %442 = vmatpush.msra.mxu0 %v412
    %443 = vmatpush.msra.mxu0 %v411
    %444 = vmatpush.msra.mxu0 %v410
    %445 = vmatmul.f32.gmra.mxu0 %v424
    %v446 = vpop.f32.mrf.mxu0
    %v447 = vadd.f32 %v420, %v446
    %448 = vmatmul.f32.gmra.mxu0 %v427
    %v449 = vpop.f32.mrf.mxu0
    %v450 = vadd.f32 %v420, %v449
    %451 = vdwg.mxu0
    %452 = vst [vmem:[#allocation2] sm:$0xff] %v447
    %453 = vst [vmem:[#allocation2 + $0x8] sm:$0xff] %v450
    // Predicated region
    $region58: #{pgsage_forward.1} parent=1 // pred_check
      _
    $region59: #{pgsage_forward.1} parent=1 // pred_check_branch
      %455 = sbr.rel (0) target = $region61
    $region60: #{pgsage_forward.1} parent=1 // pred_region
      %457 = vsyncadd [#allocation3], 0
      %s458 = sshll.u32 [#allocation2], 4
      %s459 = int_to_ptr.vmem [resolvable:$true] %s458
      %s460 = sshll.u32 %s14, 4
      %s461 = int_to_ptr.hbm [resolvable:$true] %s460
      %466 = dma.vmem_to_hbm [thread:$0]  %s459, 256, %s461, [#allocation3], 128, 128, 8
    $region61: #{pgsage_forward.1} parent=1 // pred_fallthru
      _
    // Predicated region
    $region62: #{pgsage_forward.1} parent=1 // pred_check
      _
    $region63: #{pgsage_forward.1} parent=1 // pred_check_branch
      %468 = sbr.rel (0) target = $region65
    $region64: #{pgsage_forward.1} parent=1 // pred_region
      %470 = dma.done [#allocation3], 256
    $region65: #{pgsage_forward.1} parent=1 // pred_fallthru
      _
    %471 = vsyncpa [#allocation3], 1

</llo_original>
